<compile_context>
chip_gen: v7x
topology: tpu7x:2x2x1
jax: 0.10.0
libtpu: 0.0.40
codegen_flags: <defaults>
</compile_context>

<pallas_src>
import jax
import jax.numpy as jnp
from jax.experimental import pallas as pl
from jax.experimental.pallas import tpu as pltpu


COMPUTE_DTYPE = jnp.bfloat16   # matmul-input / weight dtype; accumulation is f32


# ----------------------------- in-kernel helpers -----------------------------

def _layernorm(x, g, b, eps=1e-5):
    # statistics in f32 regardless of input dtype
    x = x.astype(jnp.float32)
    mu = jnp.mean(x, axis=-1, keepdims=True)
    xc = x - mu
    var = jnp.mean(xc * xc, axis=-1, keepdims=True)
    return xc * jax.lax.rsqrt(var + eps) * g + b


def _transformer_vmem_limit():
    """Raise the scoped-VMEM budget (review: 32 MiB < ~28 MB double-buffered
    bf16 weight working set at ViT-B).  Clamp below physical VMEM so v7x
    (64 MiB/TC) does not over-subscribe."""
    try:
        cap = pltpu.get_tpu_info().vmem_capacity_bytes
    except Exception:
        cap = 128 * 1024 * 1024
    return int(min(96 * 1024 * 1024, (cap * 3) // 4))


# ----------------------------- Pallas kernels --------------------------------

def _matmul_cast_kernel(a_ref, b_ref, o_ref):
    o_ref[...] = jnp.dot(a_ref[...], b_ref[...],
                         preferred_element_type=jnp.float32).astype(o_ref.dtype)


def patch_embed_matmul(patches, w):
    """(B*N, 3*p*p) @ (3*p*p, D) — the conv1 as a matmul, row-tiled, bf16 out."""
    M, K = patches.shape
    _, N = w.shape
    tm = M
    for cand in (2048, 1024, 512, 256, 128, 64, 32, 16, 8):
        if M % cand == 0:
            tm = cand
            break
    return pl.pallas_call(
        _matmul_cast_kernel,
        out_shape=jax.ShapeDtypeStruct((M, N), COMPUTE_DTYPE),
        grid=(M // tm,),
        in_specs=[pl.BlockSpec((tm, K), lambda i: (i, 0)),
                  pl.BlockSpec((K, N), lambda i: (0, 0))],
        out_specs=pl.BlockSpec((tm, N), lambda i: (i, 0)),
        compiler_params=pltpu.CompilerParams(
            dimension_semantics=("parallel",)),
    )(patches, w)


def _make_block_kernel(Bt, S, D, H, cdt):
    HD = D // H

    def kernel(x_ref, pos_ref, lnpre_w_ref, lnpre_b_ref,
               ln1w_ref, ln1b_ref, wqkv_ref, bqkv_ref, wo_ref, bo_ref,
               ln2w_ref, ln2b_ref, wfc_ref, bfc_ref, wproj_ref, bproj_ref,
               cls_ref, resid_ref):
        layer = pl.program_id(1)

        # ---- layer 0: pos-embed add + ln_pre fused; residual stream into VMEM
        @pl.when(layer == 0)
        def _():
            pos = pos_ref[...]
            g = lnpre_w_ref[...]
            b = lnpre_b_ref[...]
            for bi in range(Bt):
                xb = x_ref[bi].astype(jnp.float32) + pos
                resid_ref[bi] = _layernorm(xb, g, b)

        # hoist per-layer weight loads out of the per-image loop
        ln1_w, ln1_b = ln1w_ref[0], ln1b_ref[0]
        wqkv, bqkv = wqkv_ref[0], bqkv_ref[0]
        wo, bo = wo_ref[0], bo_ref[0]
        ln2_w, ln2_b = ln2w_ref[0], ln2b_ref[0]
        wfc, bfc = wfc_ref[0], bfc_ref[0]
        wproj, bproj = wproj_ref[0], bproj_ref[0]

        for bi in range(Bt):
            x = resid_ref[bi]                                    # (S, D) f32
            h = _layernorm(x, ln1_w, ln1_b)                      # (S, D) f32

            # ---- multi-head self-attention ----------------------------------
            # Fused QKV: one lane-dense (S,D)@(D,3D) matmul + (1,3D) bias.
            # HD**-0.5 is pre-folded into the Q columns of wqkv/bqkv; cast to
            # bf16 ONCE here instead of per-head.
            qkv = (jnp.dot(h.astype(cdt), wqkv,
                           preferred_element_type=jnp.float32) + bqkv).astype(cdt)

            # Per-head score/PV matmuls: short static unroll over lane slices.
            # TODO(synk): at HD=64 process lane-aligned head pairs (review).
            heads_out = []
            for hh in range(H):
                q = qkv[:, hh * HD:(hh + 1) * HD]                # (S, HD) bf16
                k = qkv[:, D + hh * HD:D + (hh + 1) * HD]
                v = qkv[:, 2 * D + hh * HD:2 * D + (hh + 1) * HD]
                s = jax.lax.dot_general(q, k, (((1,), (1,)), ((), ())),
                                        preferred_element_type=jnp.float32)
                s = s - jnp.max(s, axis=-1, keepdims=True)
                p = jnp.exp(s)
                p = p * pl.reciprocal(jnp.sum(p, axis=-1, keepdims=True),
                                      approx=True)               # EUP slot
                heads_out.append(jnp.dot(p.astype(cdt), v,
                                         preferred_element_type=jnp.float32))
            o = jnp.concatenate(heads_out, axis=-1)              # (S, D) f32

            # Single fused out-projection (S,D)@(D,D).
            attn = jnp.dot(o.astype(cdt), wo,
                           preferred_element_type=jnp.float32) + bo
            x = x + attn                                         # residual 1

            # ---- MLP ---------------------------------------------------------
            h2 = _layernorm(x, ln2_w, ln2_b)
            m = jnp.dot(h2.astype(cdt), wfc,
                        preferred_element_type=jnp.float32) + bfc
            m = m * jax.nn.sigmoid(1.702 * m)                    # QuickGELU
            m = jnp.dot(m.astype(cdt), wproj,
                        preferred_element_type=jnp.float32) + bproj
            resid_ref[bi] = x + m                                # residual 2

        # ---- last layer: emit only the CLS rows (head only uses x[:, 0, :])
        @pl.when(layer == pl.num_programs(1) - 1)
        def _():
            cls_ref[...] = resid_ref[:, 0:1, :]

    return kernel


def transformer(x, params, heads):
    """All L layers in one pallas_call: grid=(B//Bt, L); weights indexed by the
    inner 'arbitrary' layer axis (pipelined weight DMA), residual stream kept
    in a VMEM scratch across it; only CLS tokens are written back."""
    B, S, D = x.shape
    tp = params['tfm']
    L = tp['wqkv'].shape[0]
    # largest batch tile <= 8 that divides B (amortizes weight DMA over Bt imgs)
    Bt = next(bt for bt in (8, 4, 2, 1) if B % bt == 0)
    kernel = _make_block_kernel(Bt, S, D, heads, COMPUTE_DTYPE)

    def wspec(per_layer_shape):
        return pl.BlockSpec((1,) + per_layer_shape, lambda b, l: (l, 0, 0))

    def cspec(shape):
        return pl.BlockSpec(shape, lambda b, l: (0, 0))

    return pl.pallas_call(
        kernel,
        out_shape=jax.ShapeDtypeStruct((B, 1, D), jnp.float32),
        grid=(B // Bt, L),
        in_specs=[
            pl.BlockSpec((Bt, S, D), lambda b, l: (b, 0, 0)),    # tokens (bf16)
            cspec((S, D)),                                       # pos_emb
            cspec((1, D)), cspec((1, D)),                        # ln_pre w/b
            wspec((1, D)), wspec((1, D)),                        # ln1 w/b
            wspec((D, 3 * D)), wspec((1, 3 * D)),                # qkv w/b (fused)
            wspec((D, D)), wspec((1, D)),                        # out-proj w/b
            wspec((1, D)), wspec((1, D)),                        # ln2 w/b
            wspec((D, 4 * D)), wspec((1, 4 * D)),                # fc w/b
            wspec((4 * D, D)), wspec((1, D)),                    # proj w/b
        ],
        out_specs=pl.BlockSpec((Bt, 1, D), lambda b, l: (b, 0, 0)),
        scratch_shapes=[pltpu.VMEM((Bt, S, D), jnp.float32)],    # residual stream
        compiler_params=pltpu.CompilerParams(
            # TODO(synk): on v7x with small B, megacore-splitting the batch
            #             axis doubles the weight HBM stream (review note).
            dimension_semantics=("parallel", "arbitrary"),
            vmem_limit_bytes=_transformer_vmem_limit()),
    )(x, params['pos_emb'], params['ln_pre_w'], params['ln_pre_b'],
      tp['ln1_w'], tp['ln1_b'], tp['wqkv'], tp['bqkv'], tp['wo'], tp['bo'],
      tp['ln2_w'], tp['ln2_b'], tp['wfc'], tp['bfc'], tp['wproj'], tp['bproj'])


def _head_kernel(x_ref, lnw_ref, lnb_ref, bnw_ref, bnb_ref, bnm_ref, bnv_ref,
                 wc_ref, x_out_ref, att_out_ref, logits_ref):
    x = _layernorm(x_ref[...], lnw_ref[...], lnb_ref[...])       # ln_post
    x_out_ref[...] = x
    # BatchNorm1d (eval mode): running_mean / running_var
    x_att = ((x - bnm_ref[...]) * jax.lax.rsqrt(bnv_ref[...] + 1e-5)
             * bnw_ref[...] + bnb_ref[...])
    att_out_ref[...] = x_att
    logits_ref[...] = jnp.dot(x_att.astype(wc_ref.dtype), wc_ref[...],
                              preferred_element_type=jnp.float32)


def head(x_cls, params):
    B, D = x_cls.shape
    Cp = params['cls_w_t'].shape[1]          # padded to a multiple of 128
    return pl.pallas_call(
        _head_kernel,
        out_shape=(jax.ShapeDtypeStruct((B, D), jnp.float32),
                   jax.ShapeDtypeStruct((B, D), jnp.float32),
                   jax.ShapeDtypeStruct((B, Cp), jnp.float32)),
        grid=(1,),
        in_specs=[pl.BlockSpec((B, D), lambda i: (0, 0))]
        + [pl.BlockSpec((1, D), lambda i: (0, 0))] * 6
        + [pl.BlockSpec((D, Cp), lambda i: (0, 0))],
        out_specs=(pl.BlockSpec((B, D), lambda i: (0, 0)),
                   pl.BlockSpec((B, D), lambda i: (0, 0)),
                   pl.BlockSpec((B, Cp), lambda i: (0, 0))),
    )(x_cls, params['ln_post_w'], params['ln_post_b'],
      params['bn_w'], params['bn_b'], params['bn_rm'], params['bn_rv'],
      params['cls_w_t'])


# ------------------------------- forward glue ---------------------------------

def vit_forward(x_img, params, cfg):
    assert cfg['patch'] == cfg['stride'], "patch extraction assumes stride==patch"
    B = x_img.shape[0]
    p = cfg['patch']
    D = cfg['width']
    Hn, Wn = cfg['h_res'], cfg['w_res']
    N = Hn * Wn
    C = cfg['class_num']

    # conv1 as patch-extraction (glue) + Pallas matmul (bf16 inputs, f32 acc, bf16 out)
    xp = x_img.reshape(B, 3, Hn, p, Wn, p)
    xp = xp.transpose(0, 2, 4, 1, 3, 5).reshape(B * N, 3 * p * p)
    tok = patch_embed_matmul(xp.astype(COMPUTE_DTYPE),
                             params['patch_w']).reshape(B, N, D)

    # class token concat (glue); pos-embed add + ln_pre are fused into the
    # transformer kernel (layer == 0 branch)
    cls = jnp.broadcast_to(params['cls_emb'].astype(COMPUTE_DTYPE)[None, None, :],
                           (B, 1, D))
    x = jnp.concatenate([cls, tok], axis=1)                      # (B, S, D) bf16

    # transformer: all layers in one pallas_call; returns only CLS tokens
    x_cls = transformer(x, params, cfg['heads'])[:, 0, :]        # (B, D) f32

    # head: ln_post on CLS token, bottleneck BN, classifier (padded, then slice)
    feat, feat_bn, logits_p = head(x_cls, params)
    return feat, feat_bn, logits_p[:, :C]


# --------------------------- parameter construction ---------------------------

def init_params(key, cfg):
    D = cfg['width']
    p = cfg['patch']
    S = cfg['h_res'] * cfg['w_res'] + 1
    C = cfg['class_num']
    L = cfg['layers']
    scale = D ** -0.5
    keys = iter(jax.random.split(key, 64))
    nrm = lambda shape, s=0.02: s * jax.random.normal(next(keys), shape,
                                                      jnp.float32)
    raw = {
        'conv_w': nrm((D, 3, p, p)),
        'cls_emb': scale * jax.random.normal(next(keys), (D,), jnp.float32),
        'pos_emb': scale * jax.random.normal(next(keys), (S, D), jnp.float32),
        'ln_pre_w': jnp.ones((D,), jnp.float32),
        'ln_pre_b': jnp.zeros((D,), jnp.float32),
        'ln_post_w': jnp.ones((D,), jnp.float32),
        'ln_post_b': jnp.zeros((D,), jnp.float32),
        'bn_w': 1.0 + nrm((D,), 0.01),          # weights_init_kaiming for BN
        'bn_b': jnp.zeros((D,), jnp.float32),
        'bn_rm': jnp.zeros((D,), jnp.float32),
        'bn_rv': jnp.ones((D,), jnp.float32),
        'cls_w': nrm((C, D), 0.001),            # weights_init_classifier
        'layers': [],
    }
    for _ in range(L):
        raw['layers'].append({
            'ln1_w': jnp.ones((D,), jnp.float32),
            'ln1_b': jnp.zeros((D,), jnp.float32),
            'in_proj_w': nrm((3 * D, D)),
            'in_proj_b': nrm((3 * D,)),
            'out_proj_w': nrm((D, D)),
            'out_proj_b': nrm((D,)),
            'ln2_w': jnp.ones((D,), jnp.float32),
            'ln2_b': jnp.zeros((D,), jnp.float32),
            'fc_w': nrm((4 * D, D)),
            'fc_b': nrm((4 * D,)),
            'proj_w': nrm((D, 4 * D)),
            'proj_b': nrm((D,)),
        })
    return raw


def prepare_kernel_params(raw, cfg, cdt=COMPUTE_DTYPE):
    """Weights -> bf16, biases/LN/BN -> f32, lane-dense layouts, layers stacked
    along a leading L axis for the layer-grid kernel.  Attention scale is
    folded into the Q columns of wqkv/bqkv; classifier padded to 128 lanes."""
    D = cfg['width']
    p = cfg['patch']
    C = cfg['class_num']
    scale = (D // cfg['heads']) ** -0.5
    Cp = ((C + 127) // 128) * 128

    cls_w_t = jnp.pad(raw['cls_w'].T, ((0, 0), (0, Cp - C)))      # (D, Cp)

    kp = {
        'patch_w': raw['conv_w'].reshape(D, 3 * p * p).T.astype(cdt),  # (3pp, D)
        'cls_emb': raw['cls_emb'],
        'pos_emb': raw['pos_emb'],
        'ln_pre_w': raw['ln_pre_w'][None], 'ln_pre_b': raw['ln_pre_b'][None],
        'ln_post_w': raw['ln_post_w'][None], 'ln_post_b': raw['ln_post_b'][None],
        'bn_w': raw['bn_w'][None], 'bn_b': raw['bn_b'][None],
        'bn_rm': raw['bn_rm'][None], 'bn_rv': raw['bn_rv'][None],
        'cls_w_t': cls_w_t.astype(cdt),                                # (D, Cp)
    }

    def qkv_w(l):
        w = l['in_proj_w'].T                                     # (D, 3D)
        return jnp.concatenate([w[:, :D] * scale, w[:, D:]], axis=1)

    def qkv_b(l):
        b = l['in_proj_b']
        return jnp.concatenate([b[:D] * scale, b[D:]])[None]     # (1, 3D)

    ls = raw['layers']
    stack = lambda f: jnp.stack([f(l) for l in ls], axis=0)
    kp['tfm'] = {
        'ln1_w': stack(lambda l: l['ln1_w'][None]),              # (L, 1, D)
        'ln1_b': stack(lambda l: l['ln1_b'][None]),
        'wqkv': stack(qkv_w).astype(cdt),                        # (L, D, 3D) scaled Q
        'bqkv': stack(qkv_b),                                    # (L, 1, 3D) scaled Q
        'wo': stack(lambda l: l['out_proj_w'].T).astype(cdt),    # (L, D, D)
        'bo': stack(lambda l: l['out_proj_b'][None]),            # (L, 1, D)
        'ln2_w': stack(lambda l: l['ln2_w'][None]),
        'ln2_b': stack(lambda l: l['ln2_b'][None]),
        'wfc': stack(lambda l: l['fc_w'].T).astype(cdt),         # (L, D, 4D)
        'bfc': stack(lambda l: l['fc_b'][None]),                 # (L, 1, 4D)
        'wproj': stack(lambda l: l['proj_w'].T).astype(cdt),     # (L, 4D, D)
        'bproj': stack(lambda l: l['proj_b'][None]),             # (L, 1, D)
    }
    return kp


def quantize_for_ref(raw, cdt=COMPUTE_DTYPE):
    """Reference weights rounded through bf16 exactly like the kernel params,
    so the reference diff only measures in-kernel activation rounding."""
    f = lambda w: w.astype(cdt).astype(jnp.float32)
    q = dict(raw)
    q['conv_w'] = f(raw['conv_w'])
    q['cls_w'] = f(raw['cls_w'])
    q['layers'] = []
    for l in raw['layers']:
        l2 = dict(l)
        for k in ('in_proj_w', 'out_proj_w', 'fc_w', 'proj_w'):
            l2[k] = f(l[k])
        q['layers'].append(l2)
    return q


# --------------------------- pure-JAX reference (check) ------------------------

def ref_forward(x_img, raw, cfg):
    D = cfg['width']
    H = cfg['heads']
    HD = D // H
    B = x_img.shape[0]

    def ln(v, g, b):
        mu = v.mean(-1, keepdims=True)
        var = ((v - mu) ** 2).mean(-1, keepdims=True)
        return (v - mu) / jnp.sqrt(var + 1e-5) * g + b

    y = jax.lax.conv_general_dilated(
        x_img, raw['conv_w'], window_strides=(cfg['stride'], cfg['stride']),
        padding='VALID', dimension_numbers=('NCHW', 'OIHW', 'NCHW'))
    y = y.reshape(B, D, -1).transpose(0, 2, 1)                   # (B, N, D)
    cls = jnp.broadcast_to(raw['cls_emb'][None, None, :], (B, 1, D))
    x = jnp.concatenate([cls, y], axis=1) + raw['pos_emb'][None]
    x = ln(x, raw['ln_pre_w'], raw['ln_pre_b'])
    S = x.shape[1]
    for l in raw['layers']:
        h = ln(x, l['ln1_w'], l['ln1_b'])
        qkv = h @ l['in_proj_w'].T + l['in_proj_b']
        q, k, v = jnp.split(qkv, 3, axis=-1)
        sh = lambda t: t.reshape(B, S, H, HD).transpose(0, 2, 1, 3)
        q = sh(q) * (HD ** -0.5)
        k, v = sh(k), sh(v)
        att = jax.nn.softmax(jnp.einsum('bhqd,bhkd->bhqk', q, k), axis=-1)
        o = jnp.einsum('bhqk,bhkd->bhqd', att, v)
        o = o.transpose(0, 2, 1, 3).reshape(B, S, D)
        o = o @ l['out_proj_w'].T + l['out_proj_b']
        x = x + o
        h2 = ln(x, l['ln2_w'], l['ln2_b'])
        m = h2 @ l['fc_w'].T + l['fc_b']
        m = m * jax.nn.sigmoid(1.702 * m)
        x = x + (m @ l['proj_w'].T + l['proj_b'])
    x_cls = ln(x[:, 0, :], raw['ln_post_w'], raw['ln_post_b'])
    x_att = ((x_cls - raw['bn_rm']) / jnp.sqrt(raw['bn_rv'] + 1e-5)
             * raw['bn_w'] + raw['bn_b'])
    out = x_att @ raw['cls_w'].T
    return x_cls, x_att, out


# ------------------------------------ main ------------------------------------

if __name__ == "__main__":
    cfg = dict(class_num=10, h_res=4, w_res=4, patch=4, stride=4,
               width=64, layers=2, heads=4)
    key = jax.random.PRNGKey(0)
    p_key, x_key = jax.random.split(key)
    raw = init_params(p_key, cfg)
    params = prepare_kernel_params(raw, cfg)

    # input image: (B=2, C=3, H=16, W=16), NCHW like PyTorch
    x_img = jax.random.normal(x_key, (2, 3, 16, 16), jnp.float32)

    feat, feat_bn, logits = vit_forward(x_img, params, cfg)
    jax.block_until_ready((feat, feat_bn, logits))

    # sanity check against a pure-JAX reference using the same bf16-rounded
    # weights (tolerance accounts for bf16 activation rounding + approx recip)
    raw_q = quantize_for_ref(raw)
    r_feat, r_feat_bn, r_logits = ref_forward(x_img, raw_q, cfg)
    assert feat.shape == (2, cfg['width'])
    assert feat_bn.shape == (2, cfg['width'])
    assert logits.shape == (2, cfg['class_num'])
    assert jnp.allclose(feat, r_feat, atol=2e-2, rtol=2e-2)
    assert jnp.allclose(feat_bn, r_feat_bn, atol=2e-2, rtol=2e-2)
    assert jnp.allclose(logits, r_logits, atol=2e-2, rtol=2e-2)

    print("KERNEL_OK")
</pallas_src>

<mosaic_0001>
module attributes {stable_mosaic.version = 11 : i64} {
  func.func @_matmul_cast_kernel(%arg0: i32, %arg1: memref<32x48xbf16, #tpu.memory_space<vmem>>, %arg2: memref<48x64xbf16, #tpu.memory_space<vmem>>, %arg3: memref<32x64xbf16, #tpu.memory_space<vmem>>) attributes {dimension_semantics = [#tpu.dimension_semantics<parallel>], iteration_bounds = array<i64: 1>, scalar_prefetch = 0 : i64, scratch_operands = 0 : i64, tpu.core_type = #tpu.core_type<tc>, window_params = [{transform_indices = @transform_0, window_bounds = array<i64: 32, 48>}, {pipeline_mode = #tpu.pipeline_mode<synchronous>, transform_indices = @transform_1, window_bounds = array<i64: 48, 64>}, {transform_indices = @transform_2, window_bounds = array<i64: 32, 64>}]} {
    %c0 = arith.constant 0 : index
    %c0_0 = arith.constant 0 : index
    %0 = vector.load %arg1[%c0, %c0_0] : memref<32x48xbf16, #tpu.memory_space<vmem>>, vector<32x48xbf16>
    %c0_1 = arith.constant 0 : index
    %c0_2 = arith.constant 0 : index
    %1 = vector.load %arg2[%c0_1, %c0_2] : memref<48x64xbf16, #tpu.memory_space<vmem>>, vector<48x64xbf16>
    %cst = arith.constant dense<0.000000e+00> : vector<32x64xf32>
    %2 = tpu.matmul %0, %1, %cst {dimension_numbers = #tpu.dot_dimension_numbers<[1], [0], [0], [1], [0, 0, 1, 1], [], []>} : vector<32x48xbf16>, vector<48x64xbf16>, vector<32x64xf32> -> vector<32x64xf32>
    %3 = arith.truncf %2 : vector<32x64xf32> to vector<32x64xbf16>
    %c0_3 = arith.constant 0 : index
    %c0_4 = arith.constant 0 : index
    %4 = vector.load %arg3[%c0_3, %c0_4] : memref<32x64xbf16, #tpu.memory_space<vmem>>, vector<32x64xbf16>
    tpu.vector_store %arg3[%c0_3, %c0_4], %3 {strides = array<i32>} : memref<32x64xbf16, #tpu.memory_space<vmem>>, vector<32x64xbf16>,
    return
  }
  func.func @transform_0(%arg0: i32) -> (i32, i32) {
    %c0_i32 = arith.constant 0 : i32
    %c0_i32_0 = arith.constant 0 : i32
    return %arg0, %c0_i32 : i32, i32
  }
  func.func @transform_1(%arg0: i32) -> (i32, i32) {
    %c0_i32 = arith.constant 0 : i32
    %c0_i32_0 = arith.constant 0 : i32
    %c0_i32_1 = arith.constant 0 : i32
    return %c0_i32, %c0_i32_0 : i32, i32
  }
  func.func @transform_2(%arg0: i32) -> (i32, i32) {
    %c0_i32 = arith.constant 0 : i32
    %c0_i32_0 = arith.constant 0 : i32
    return %arg0, %c0_i32 : i32, i32
  }
}

</mosaic_0001>

<llo_original>
// kernel: tpu_custom_call.1
$region0: #{tpu_custom_call.1}
  #allocation0 [shape = 'u32[]', space=smem, size = 0x4, offset = 0x4, fixed_abs, tag = 'smem constant byte address 0x4 - core index']
  #allocation1 [shape = 'u32[144,128]{1,0:T(1,128)}', space=vmem, size = 0x12000, scoped, tag = 'internal scratch']
  %s0 = inlined_call_operand.hbm [shape: bf16[32,48], index: 0, kind: input, shape index: {}]
  %s1 = inlined_call_operand.hbm [shape: bf16[48,64], index: 1, kind: input, shape index: {}]
  %s2 = inlined_call_operand.hbm [shape: bf16[32,64], index: 2, kind: output, shape index: {}]
  %s3 = sld [smem:[#allocation0]]
  $region26: #{tpu_custom_call.1} parent=0
    _
  %s5 = ssub.s32 1, %s3
  %s6 = scalar_select 0, %s5, %s3
  $region1: #{tpu_custom_call.1} parent=0
    #allocation2 [shape = 'u8[8192]{0}', space=vmem, size = 0x2000, scoped, tag = 'input window, operand 0, single buffered']
    #allocation3 [shape = 's32[1]{0}', space=sflag, size = 0x4, scoped, tag = 'scoped memory for tpu_custom_call.1']
    #allocation4 [shape = 's32[1]{0}', space=sflag, size = 0x4, scoped, tag = 'scoped memory for tpu_custom_call.1']
    #allocation5 [shape = 'u8[12288]{0}', space=vmem, size = 0x3000, scoped, tag = 'input window, operand 1, single buffered']
    #allocation6 [shape = 's32[1]{0}', space=sflag, size = 0x4, scoped, tag = 'scoped memory for tpu_custom_call.1']
    #allocation7 [shape = 'u8[8192]{0}', space=vmem, size = 0x2000, scoped, tag = 'output window, operand 0, single buffered']
    %7 = vsyncpa [#allocation3], 0
    %8 = vsyncpa [#allocation6], 0
    %9 = vsyncpa [#allocation4], 0
    // Predicated region
    $region2: #{tpu_custom_call.1} parent=1 // pred_check
      _
    $region3: #{tpu_custom_call.1} parent=1 // pred_check_branch
      %11 = sbr.rel (0) target = $region5
    $region4: #{tpu_custom_call.1} parent=1 // pred_region
      %s13 = ssub.s32 256, 256
      %14 = vsyncadd [#allocation3], %s13
      %s15 = sshll.u32 [#allocation2], 4
      %s16 = int_to_ptr.vmem [resolvable:$true] %s15
      %21 = dma.hbm_to_vmem [thread:$0]  %s0, 256, %s16, [#allocation3], 64, 64, 4
    $region5: #{tpu_custom_call.1} parent=1 // pred_fallthru
      _
    // Predicated region
    $region6: #{tpu_custom_call.1} parent=1 // pred_check
      _
    $region7: #{tpu_custom_call.1} parent=1 // pred_check_branch
      %23 = sbr.rel (0) target = $region9
    $region8: #{tpu_custom_call.1} parent=1 // pred_region
      %s25 = ssub.s32 384, 384
      %26 = vsyncadd [#allocation6], %s25
      %s27 = sshll.u32 [#allocation5], 4
      %s28 = int_to_ptr.vmem [resolvable:$true] %s27
      %33 = dma.hbm_to_vmem [thread:$0]  %s1, 384, %s28, [#allocation6], 64, 64, 4
    $region9: #{tpu_custom_call.1} parent=1 // pred_fallthru
      _
    // Predicated region
    $region10: #{tpu_custom_call.1} parent=1 // pred_check
      _
    $region11: #{tpu_custom_call.1} parent=1 // pred_check_branch
      %35 = sbr.rel (0) target = $region13
    $region12: #{tpu_custom_call.1} parent=1 // pred_region
      %36 = dma.done [#allocation3], 256
    $region13: #{tpu_custom_call.1} parent=1 // pred_fallthru
      _
    // Predicated region
    $region14: #{tpu_custom_call.1} parent=1 // pred_check
      _
    $region15: #{tpu_custom_call.1} parent=1 // pred_check_branch
      %38 = sbr.rel (0) target = $region17
    $region16: #{tpu_custom_call.1} parent=1 // pred_region
      %39 = dma.done [#allocation6], 384
    $region17: #{tpu_custom_call.1} parent=1 // pred_fallthru
      _
    %v41 = vld [vmem:[#allocation2] sm:$0xf]
    %v42 = vld [vmem:[#allocation2 + $0x4] sm:$0xf]
    %v43 = vld [vmem:[#allocation2 + $0x8] sm:$0xf]
    %v44 = vld [vmem:[#allocation2 + $0xc] sm:$0xf]
    %v45 = vld [vmem:[#allocation5] sm:$0xf]
    %v46 = vld [vmem:[#allocation5 + $0x4] sm:$0xf]
    %v47 = vld [vmem:[#allocation5 + $0x8] sm:$0xf]
    %v48 = vld [vmem:[#allocation5 + $0xc] sm:$0xf]
    %v49 = vld [vmem:[#allocation5 + $0x10] sm:$0xf]
    %v50 = vld [vmem:[#allocation5 + $0x14] sm:$0xf]
    %v55 = vunpack.c.l.b16 %v41
    %v56 = vunpack.c.l.b16 %v42
    %v57 = vunpack.c.l.b16 %v43
    %v58 = vunpack.c.l.b16 %v44
    %v59 = vpack.c.b16 %v56, %v55
    %v60 = vpack.c.b16 %v58, %v57
    %v67 = vunpack.c.l.b16 %v45
    %v68 = vunpack.c.l.b16 %v46
    %v69 = vunpack.c.l.b16 %v47
    %v70 = vunpack.c.l.b16 %v48
    %v71 = vunpack.c.l.b16 %v49
    %v72 = vunpack.c.l.b16 %v50
    %v73 = vpack.c.b16 %v68, %v67
    %v74 = vpack.c.b16 %v70, %v69
    %v75 = vpack.c.b16 %v72, %v71
    %vm79 = vcmask 392192
    %v81 = vsel %vm79, %v59, 0
    %v84 = vsel %vm79, %v60, 0
    %86 = vmatprep.subr.bf16.mxu0 0
    %87 = vmatpush1.bf16.msra.mxu0 %v73
    %88 = vmatprep.subr.bf16.mxu0 0
    %89 = vmatpush1.bf16.msra.mxu0 %v74
    %90 = vmatprep.subr.bf16.mxu0 0
    %91 = vmatpush1.bf16.msra.mxu0 %v75
    %92 = vmatprep.subr.bf16.mxu0 0
    %93 = vmatpush1.bf16.msra.mxu0 0
    %94 = vmatprep.subr.bf16.mxu0 0
    %95 = vmatpush1.bf16.msra.mxu0 0
    %96 = vmatprep.subr.bf16.mxu0 0
    %97 = vmatpush1.bf16.msra.mxu0 0
    %98 = vmatprep.subr.bf16.mxu0 0
    %99 = vmatpush1.bf16.msra.mxu0 0
    %100 = vmatprep.subr.bf16.mxu0 0
    %101 = vmatpush1.bf16.msra.mxu0 0
    %102 = vmatprep.subr.bf16.mxu0 0
    %103 = vmatpush1.bf16.msra.mxu0 0
    %104 = vmatprep.subr.bf16.mxu0 0
    %105 = vmatpush1.bf16.msra.mxu0 0
    %106 = vmatprep.subr.bf16.mxu0 0
    %107 = vmatpush1.bf16.msra.mxu0 0
    %108 = vmatprep.subr.bf16.mxu0 0
    %109 = vmatpush1.bf16.msra.mxu0 0
    %110 = vmatprep.subr.bf16.mxu0 0
    %111 = vmatpush1.bf16.msra.mxu0 0
    %112 = vmatprep.subr.bf16.mxu0 0
    %113 = vmatpush1.bf16.msra.mxu0 0
    %114 = vmatprep.subr.bf16.mxu0 0
    %115 = vmatpush1.bf16.msra.mxu0 0
    %116 = vmatprep.subr.bf16.mxu0 0
    %117 = vmatpush1.bf16.msra.mxu0 0
    %118 = vmatprep.mubr.bf16.mxu0 0
    %119 = vmatmul.mubr.bf16.gmra.mrb[0].mxu0 %v81
    %v120 = vpop.f32.mrb[0].mxu0
    %v121 = vadd.f32 0.0, %v120
    %v122 = vpop.f32.mrb[0].mxu0
    %v123 = vpop.f32.mrb[0].mxu0
    %v124 = vadd.f32 0.0, %v123
    %v125 = vpop.f32.mrb[0].mxu0
    %126 = vmatprep.mubr.bf16.mxu0 0
    %127 = vmatmul.mubr.bf16.gmra.mrb[0].mxu0 %v84
    %v128 = vpop.f32.mrb[0].mxu0
    %v129 = vadd.f32 0.0, %v128
    %v130 = vpop.f32.mrb[0].mxu0
    %v131 = vpop.f32.mrb[0].mxu0
    %v132 = vadd.f32 0.0, %v131
    %v133 = vpop.f32.mrb[0].mxu0
    %134 = vdwg.mxu0
    %v135 = vpack.c.bf16 %v124, %v121
    %v136 = vpack.c.bf16 %v132, %v129
    %v139 = vunpack.c.l.b16 %v135
    %v140 = vunpack.c.h.b16 %v135
    %v141 = vunpack.c.l.b16 %v136
    %v142 = vunpack.c.h.b16 %v136
    %v143 = vpack.c.b16 %v139, %v139
    %v144 = vpack.c.b16 %v140, %v140
    %v145 = vpack.c.b16 %v141, %v141
    %v146 = vpack.c.b16 %v142, %v142
    %vm151 = vcmask 519168
    %152 = vst.msk [vmem:[#allocation7] sm:$0xf] %vm151, %v143
    %153 = vst.msk [vmem:[#allocation7 + $0x4] sm:$0xf] %vm151, %v144
    %154 = vst.msk [vmem:[#allocation7 + $0x8] sm:$0xf] %vm151, %v145
    %155 = vst.msk [vmem:[#allocation7 + $0xc] sm:$0xf] %vm151, %v146
    // Predicated region
    $region18: #{tpu_custom_call.1} parent=1 // pred_check
      _
    $region19: #{tpu_custom_call.1} parent=1 // pred_check_branch
      %157 = sbr.rel (0) target = $region21
    $region20: #{tpu_custom_call.1} parent=1 // pred_region
      %s159 = ssub.s32 256, 256
      %160 = vsyncadd [#allocation4], %s159
      %s161 = sshll.u32 [#allocation7], 4
      %s162 = int_to_ptr.vmem [resolvable:$true] %s161
      %167 = dma.vmem_to_hbm [thread:$0]  %s162, 256, %s2, [#allocation4], 64, 64, 4
    $region21: #{tpu_custom_call.1} parent=1 // pred_fallthru
      _
    // Predicated region
    $region22: #{tpu_custom_call.1} parent=1 // pred_check
      _
    $region23: #{tpu_custom_call.1} parent=1 // pred_check_branch
      %169 = sbr.rel (0) target = $region25
    $region24: #{tpu_custom_call.1} parent=1 // pred_region
      %170 = dma.done [#allocation4], 256
    $region25: #{tpu_custom_call.1} parent=1 // pred_fallthru
      _
    %171 = vsyncpa [#allocation3], 1
    %172 = vsyncpa [#allocation6], 1
    %173 = vsyncpa [#allocation4], 1

</llo_original>
